<compile_context>
chip_gen: v6e
topology: v6e:2x2x1
jax: 0.10.0
libtpu: 0.0.40
codegen_flags: <defaults>
</compile_context>

<pallas_src>
import functools

import jax
import jax.numpy as jnp
from jax.experimental import pallas as pl
from jax.experimental.pallas import tpu as pltpu


def mlp_kernel(x_ref, w_ref, b_ref, wf_ref, bf_ref, o_ref, *, n_layers):
    # x_ref : (TILE_B, D)   bf16 activations for this batch tile
    # w_ref : (L, D, D)     bf16 stacked hidden weights (in, out), VMEM-resident
    # b_ref : (L, 1, D)     f32 stacked hidden biases (lane-major)
    # wf_ref: (1, D)        f32 final-layer weight row (out=1, in=D)
    # bf_ref: (1, 1)        f32 final-layer bias
    # o_ref : (1, TILE_B)   f32 sigmoid output, lane-dense
    h_bf16 = x_ref[...]                       # bf16 MXU operand
    h_f32 = h_bf16.astype(jnp.float32)        # only used if n_layers == 0
    for layer in range(n_layers):             # static unroll; weights stay in VMEM
        acc = jnp.dot(h_bf16, w_ref[layer],
                      preferred_element_type=jnp.float32)       # MXU, f32 acc
        h_f32 = jnp.maximum(acc + b_ref[layer], 0.0)            # bias + ReLU (f32 VPU)
        h_bf16 = h_f32.astype(jnp.bfloat16)
    # Final Linear(D, 1): an N=1 matmul wastes the MXU -> VPU multiply + lane reduce.
    logits = jnp.sum(h_f32 * wf_ref[...], axis=-1) + bf_ref[0, 0]   # (TILE_B,)
    sig = pl.reciprocal(1.0 + jnp.exp(-logits), approx=True)        # EUP sigmoid
    o_ref[...] = sig.reshape(1, -1)
    # TODO(synk): optional BatchNorm1d branch (batch_norm=True) not implemented.


@functools.partial(jax.jit, static_argnames=("n_layers", "tile_b"))
def mlp_forward(x, w_stack, b_stack, w_final, b_final, *, n_layers, tile_b=256):
    B, D = x.shape

    if B <= tile_b:
        # Single full-extent tile: pad only to the 8-row sublane boundary.
        tile_eff = max(8, ((B + 7) // 8) * 8)
        num_tiles = 1
    else:
        tile_eff = tile_b                      # must be a multiple of 128 (lane-dense out)
        num_tiles = pl.cdiv(B, tile_eff)
    b_pad = num_tiles * tile_eff

    x_bf16 = x.astype(jnp.bfloat16)            # halve activation DMA bytes
    if b_pad != B:
        # Zero-padded rows flow through harmlessly and are sliced off below.
        x_bf16 = jnp.pad(x_bf16, ((0, b_pad - B), (0, 0)))

    # TODO(synk): for large L*D^2 (weight stacks that do not fit resident in VMEM,
    # esp. v7x's 64 MiB), stream one layer's weights at a time with a manual
    # double-buffered DMA instead of keeping the full (L, D, D) stack resident.
    out = pl.pallas_call(
        functools.partial(mlp_kernel, n_layers=n_layers),
        out_shape=jax.ShapeDtypeStruct((1, b_pad), jnp.float32),
        grid=(num_tiles,),
        in_specs=[
            pl.BlockSpec((tile_eff, D), lambda i: (i, 0)),        # batch-tiled x
            pl.BlockSpec((n_layers, D, D), lambda i: (0, 0, 0)),  # resident weights
            pl.BlockSpec((n_layers, 1, D), lambda i: (0, 0, 0)),  # resident biases
            pl.BlockSpec((1, D), lambda i: (0, 0)),               # final weight row
            pl.BlockSpec((1, 1), lambda i: (0, 0)),               # final bias
        ],
        out_specs=pl.BlockSpec((1, tile_eff), lambda i: (0, i)),  # lane-dense output
        compiler_params=pltpu.CompilerParams(
            dimension_semantics=("parallel",),     # shard batch tiles across TCs (v7x)
            vmem_limit_bytes=32 * 1024 * 1024,     # explicit budget, safe on v5e/v6e/v7x
        ),
    )(x_bf16, w_stack, b_stack, w_final, b_final)

    return out[0, :B]  # .squeeze() of the PyTorch module -> (B,)


def init_params(key, n_layers, input_size):
    """Deterministic PyTorch-default-style init: U(-1/sqrt(fan_in), 1/sqrt(fan_in))."""
    D = input_size
    keys = jax.random.split(key, 2 * n_layers + 2)
    bound = 1.0 / jnp.sqrt(jnp.float32(D))
    w_list, b_list = [], []
    for i in range(n_layers):
        # PyTorch stores (out, in); transpose to (in, out) for the kernel.
        w_pt = jax.random.uniform(keys[2 * i], (D, D), jnp.float32, -bound, bound)
        b = jax.random.uniform(keys[2 * i + 1], (D,), jnp.float32, -bound, bound)
        w_list.append(w_pt.T)
        b_list.append(b)
    w_stack = jnp.stack(w_list).astype(jnp.bfloat16)   # (L, D, D) bf16 MXU operand
    b_stack = jnp.stack(b_list)[:, None, :]            # (L, 1, D) f32, D on lanes
    # Final layer: PyTorch (out=1, in=D) row is exactly what the VPU reduce needs.
    wf_pt = jax.random.uniform(keys[-2], (1, D), jnp.float32, -bound, bound)
    bf = jax.random.uniform(keys[-1], (1, 1), jnp.float32, -bound, bound)
    return w_stack, b_stack, wf_pt, bf


def mlp_reference_bf16(x, w_stack, b_stack, w_final, b_final, n_layers):
    """Mirrors the kernel arithmetic (bf16 matmul operands, f32 accumulate/epilogue)."""
    h_bf16 = x.astype(jnp.bfloat16)
    h_f32 = x.astype(jnp.float32)
    for layer in range(n_layers):
        acc = jnp.dot(h_bf16, w_stack[layer], preferred_element_type=jnp.float32)
        h_f32 = jnp.maximum(acc + b_stack[layer, 0], 0.0)
        h_bf16 = h_f32.astype(jnp.bfloat16)
    logits = jnp.sum(h_f32 * w_final[0], axis=-1) + b_final[0, 0]
    return jax.nn.sigmoid(logits)


def mlp_reference_f32(x, w_stack, b_stack, w_final, b_final, n_layers):
    """PyTorch-semantics reference in full f32 (same bf16-stored weights)."""
    h = x
    for layer in range(n_layers):
        h = jnp.maximum(h @ w_stack[layer].astype(jnp.float32) + b_stack[layer, 0], 0.0)
    logits = h @ w_final[0] + b_final[0, 0]
    return jax.nn.sigmoid(logits)


if __name__ == "__main__":
    n_layers = 3
    input_size = 128   # keep D a multiple of 128 (lane width / MXU K,N)
    batch = 200        # deliberately not a multiple of the batch tile

    key = jax.random.PRNGKey(0)
    k_x, k_p = jax.random.split(key)
    x = jax.random.normal(k_x, (batch, input_size), jnp.float32)
    w_stack, b_stack, w_final, b_final = init_params(k_p, n_layers, input_size)

    y = mlp_forward(x, w_stack, b_stack, w_final, b_final,
                    n_layers=n_layers, tile_b=128)
    y = jax.block_until_ready(y)

    y_ref = mlp_reference_bf16(x, w_stack, b_stack, w_final, b_final, n_layers)
    y_f32 = mlp_reference_f32(x, w_stack, b_stack, w_final, b_final, n_layers)

    assert y.shape == (batch,)
    assert bool(jnp.all(jnp.isfinite(y)))
    assert jnp.allclose(y, y_ref, atol=2e-3, rtol=2e-3), \
        float(jnp.max(jnp.abs(y - y_ref)))
    assert jnp.allclose(y, y_f32, atol=5e-2, rtol=5e-2), \
        float(jnp.max(jnp.abs(y - y_f32)))
    print("KERNEL_OK")
</pallas_src>

<mosaic_0001>
module attributes {stable_mosaic.version = 11 : i64} {
  func.func @mlp_kernel(%arg0: i32, %arg1: memref<128x128xbf16, #tpu.memory_space<vmem>>, %arg2: memref<3x128x128xbf16, #tpu.memory_space<vmem>>, %arg3: memref<3x1x128xf32, #tpu.memory_space<vmem>>, %arg4: memref<1x128xf32, #tpu.memory_space<vmem>>, %arg5: memref<1x1xf32, #tpu.memory_space<vmem>>, %arg6: memref<1x128xf32, #tpu.memory_space<vmem>>) attributes {dimension_semantics = [#tpu.dimension_semantics<parallel>], iteration_bounds = array<i64: 2>, scalar_prefetch = 0 : i64, scratch_operands = 0 : i64, tpu.core_type = #tpu.core_type<tc>, window_params = [{transform_indices = @transform_0, window_bounds = array<i64: 128, 128>}, {pipeline_mode = #tpu.pipeline_mode<synchronous>, transform_indices = @transform_1, window_bounds = array<i64: 3, 128, 128>}, {pipeline_mode = #tpu.pipeline_mode<synchronous>, transform_indices = @transform_2, window_bounds = array<i64: 3, 1, 128>}, {pipeline_mode = #tpu.pipeline_mode<synchronous>, transform_indices = @transform_3, window_bounds = array<i64: 1, 128>}, {pipeline_mode = #tpu.pipeline_mode<synchronous>, transform_indices = @transform_4, window_bounds = array<i64: 1, 1>}, {transform_indices = @transform_5, window_bounds = array<i64: 1, 128>}]} {
    %c0 = arith.constant 0 : index
    %c0_0 = arith.constant 0 : index
    %0 = vector.load %arg1[%c0, %c0_0] : memref<128x128xbf16, #tpu.memory_space<vmem>>, vector<128x128xbf16>
    %c0_1 = arith.constant 0 : index
    %c0_2 = arith.constant 0 : index
    %c0_3 = arith.constant 0 : index
    %1 = vector.load %arg2[%c0_1, %c0_2, %c0_3] : memref<3x128x128xbf16, #tpu.memory_space<vmem>>, vector<1x128x128xbf16>
    %2 = vector.shape_cast %1 : vector<1x128x128xbf16> to vector<128x128xbf16>
    %cst = arith.constant dense<0.000000e+00> : vector<128x128xf32>
    %3 = tpu.matmul %0, %2, %cst {dimension_numbers = #tpu.dot_dimension_numbers<[1], [0], [0], [1], [0, 0, 1, 1], [], []>} : vector<128x128xbf16>, vector<128x128xbf16>, vector<128x128xf32> -> vector<128x128xf32>
    %c0_4 = arith.constant 0 : index
    %c0_5 = arith.constant 0 : index
    %c0_6 = arith.constant 0 : index
    %4 = vector.load %arg3[%c0_4, %c0_5, %c0_6] : memref<3x1x128xf32, #tpu.memory_space<vmem>>, vector<1x1x128xf32>
    %5 = vector.shape_cast %4 : vector<1x1x128xf32> to vector<1x128xf32>
    %6 = vector.broadcast %5 : vector<1x128xf32> to vector<128x128xf32>
    %7 = arith.addf %3, %6 : vector<128x128xf32>
    %cst_7 = arith.constant 0.000000e+00 : f32
    %8 = vector.broadcast %cst_7 : f32 to vector<128x128xf32>
    %9 = arith.maximumf %7, %8 : vector<128x128xf32>
    %10 = arith.truncf %9 : vector<128x128xf32> to vector<128x128xbf16>
    %c1 = arith.constant 1 : index
    %c0_8 = arith.constant 0 : index
    %c0_9 = arith.constant 0 : index
    %11 = vector.load %arg2[%c1, %c0_8, %c0_9] : memref<3x128x128xbf16, #tpu.memory_space<vmem>>, vector<1x128x128xbf16>
    %12 = vector.shape_cast %11 : vector<1x128x128xbf16> to vector<128x128xbf16>
    %cst_10 = arith.constant dense<0.000000e+00> : vector<128x128xf32>
    %13 = tpu.matmul %10, %12, %cst_10 {dimension_numbers = #tpu.dot_dimension_numbers<[1], [0], [0], [1], [0, 0, 1, 1], [], []>} : vector<128x128xbf16>, vector<128x128xbf16>, vector<128x128xf32> -> vector<128x128xf32>
    %c1_11 = arith.constant 1 : index
    %c0_12 = arith.constant 0 : index
    %c0_13 = arith.constant 0 : index
    %14 = vector.load %arg3[%c1_11, %c0_12, %c0_13] : memref<3x1x128xf32, #tpu.memory_space<vmem>>, vector<1x1x128xf32>
    %15 = vector.shape_cast %14 : vector<1x1x128xf32> to vector<1x128xf32>
    %16 = vector.broadcast %15 : vector<1x128xf32> to vector<128x128xf32>
    %17 = arith.addf %13, %16 : vector<128x128xf32>
    %cst_14 = arith.constant 0.000000e+00 : f32
    %18 = vector.broadcast %cst_14 : f32 to vector<128x128xf32>
    %19 = arith.maximumf %17, %18 : vector<128x128xf32>
    %20 = arith.truncf %19 : vector<128x128xf32> to vector<128x128xbf16>
    %c2 = arith.constant 2 : index
    %c0_15 = arith.constant 0 : index
    %c0_16 = arith.constant 0 : index
    %21 = vector.load %arg2[%c2, %c0_15, %c0_16] : memref<3x128x128xbf16, #tpu.memory_space<vmem>>, vector<1x128x128xbf16>
    %22 = vector.shape_cast %21 : vector<1x128x128xbf16> to vector<128x128xbf16>
    %cst_17 = arith.constant dense<0.000000e+00> : vector<128x128xf32>
    %23 = tpu.matmul %20, %22, %cst_17 {dimension_numbers = #tpu.dot_dimension_numbers<[1], [0], [0], [1], [0, 0, 1, 1], [], []>} : vector<128x128xbf16>, vector<128x128xbf16>, vector<128x128xf32> -> vector<128x128xf32>
    %c2_18 = arith.constant 2 : index
    %c0_19 = arith.constant 0 : index
    %c0_20 = arith.constant 0 : index
    %24 = vector.load %arg3[%c2_18, %c0_19, %c0_20] : memref<3x1x128xf32, #tpu.memory_space<vmem>>, vector<1x1x128xf32>
    %25 = vector.shape_cast %24 : vector<1x1x128xf32> to vector<1x128xf32>
    %26 = vector.broadcast %25 : vector<1x128xf32> to vector<128x128xf32>
    %27 = arith.addf %23, %26 : vector<128x128xf32>
    %cst_21 = arith.constant 0.000000e+00 : f32
    %28 = vector.broadcast %cst_21 : f32 to vector<128x128xf32>
    %29 = arith.maximumf %27, %28 : vector<128x128xf32>
    %c0_22 = arith.constant 0 : index
    %c0_23 = arith.constant 0 : index
    %30 = vector.load %arg4[%c0_22, %c0_23] : memref<1x128xf32, #tpu.memory_space<vmem>>, vector<1x128xf32>
    %31 = vector.broadcast %30 : vector<1x128xf32> to vector<128x128xf32>
    %32 = arith.mulf %29, %31 : vector<128x128xf32>
    %cst_24 = arith.constant dense<0.000000e+00> : vector<128xf32>
    %33 = vector.multi_reduction <add>, %32, %cst_24 [1] : vector<128x128xf32> to vector<128xf32>
    %c0_25 = arith.constant 0 : index
    %c0_26 = arith.constant 0 : index
    %34 = vector.load %arg5[%c0_25, %c0_26] : memref<1x1xf32, #tpu.memory_space<vmem>>, vector<1x1xf32>
    %35 = vector.extract %34[0, 0] : f32 from vector<1x1xf32>
    %36 = vector.broadcast %35 : f32 to vector<128xf32>
    %37 = arith.addf %33, %36 : vector<128xf32>
    %cst_27 = arith.constant 0.000000e+00 : f32
    %38 = vector.broadcast %cst_27 : f32 to vector<128xf32>
    %39 = arith.subf %38, %37 : vector<128xf32>
    %40 = math.exp %39 : vector<128xf32>
    %cst_28 = arith.constant 1.000000e+00 : f32
    %41 = vector.broadcast %cst_28 : f32 to vector<128xf32>
    %42 = arith.addf %41, %40 : vector<128xf32>
    %43 = tpu.reciprocal %42 {approx = true} : vector<128xf32> -> vector<128xf32>
    %44 = vector.shape_cast %43 : vector<128xf32> to vector<1x128xf32>
    %c0_29 = arith.constant 0 : index
    %c0_30 = arith.constant 0 : index
    %45 = vector.load %arg6[%c0_29, %c0_30] : memref<1x128xf32, #tpu.memory_space<vmem>>, vector<1x128xf32>
    tpu.vector_store %arg6[%c0_29, %c0_30], %44 {strides = array<i32>} : memref<1x128xf32, #tpu.memory_space<vmem>>, vector<1x128xf32>,
    return
  }
  func.func @transform_0(%arg0: i32) -> (i32, i32) {
    %c0_i32 = arith.constant 0 : i32
    %c0_i32_0 = arith.constant 0 : i32
    return %arg0, %c0_i32 : i32, i32
  }
  func.func @transform_1(%arg0: i32) -> (i32, i32, i32) {
    %c0_i32 = arith.constant 0 : i32
    %c0_i32_0 = arith.constant 0 : i32
    %c0_i32_1 = arith.constant 0 : i32
    %c0_i32_2 = arith.constant 0 : i32
    return %c0_i32, %c0_i32_0, %c0_i32_1 : i32, i32, i32
  }
  func.func @transform_2(%arg0: i32) -> (i32, i32, i32) {
    %c0_i32 = arith.constant 0 : i32
    %c0_i32_0 = arith.constant 0 : i32
    %c0_i32_1 = arith.constant 0 : i32
    %c0_i32_2 = arith.constant 0 : i32
    return %c0_i32, %c0_i32_0, %c0_i32_1 : i32, i32, i32
  }
  func.func @transform_3(%arg0: i32) -> (i32, i32) {
    %c0_i32 = arith.constant 0 : i32
    %c0_i32_0 = arith.constant 0 : i32
    %c0_i32_1 = arith.constant 0 : i32
    return %c0_i32, %c0_i32_0 : i32, i32
  }
  func.func @transform_4(%arg0: i32) -> (i32, i32) {
    %c0_i32 = arith.constant 0 : i32
    %c0_i32_0 = arith.constant 0 : i32
    %c0_i32_1 = arith.constant 0 : i32
    return %c0_i32, %c0_i32_0 : i32, i32
  }
  func.func @transform_5(%arg0: i32) -> (i32, i32) {
    %c0_i32 = arith.constant 0 : i32
    %c0_i32_0 = arith.constant 0 : i32
    return %c0_i32, %arg0 : i32, i32
  }
}

</mosaic_0001>

<llo_original>
// kernel: mlp_forward.1
$region0: #{mlp_forward.1}
  #allocation0 [shape = 'u32[]', space=smem, size = 0x4, offset = 0x4, fixed_abs, tag = 'smem constant byte address 0x4 - core index']
  #allocation1 [shape = 'u32[144,128]{1,0:T(1,128)}', space=vmem, size = 0x12000, scoped, tag = 'internal scratch']
  #allocation2 [shape = 'f32[1,1]{1,0:T(1,128)S(1)}', space=vmem, size = 0x200, scoped, tag = 'scoped memory for mlp_forward.1']
  %s0 = inlined_call_operand.vmem [shape: bf16[256,128], index: 0, kind: input, shape index: {}]
  %s1 = inlined_call_operand.vmem [shape: bf16[3,128,128], index: 1, kind: input, shape index: {}]
  %s2 = inlined_call_operand.vmem [shape: f32[3,1,128], index: 2, kind: input, shape index: {}]
  %s3 = inlined_call_operand.vmem [shape: f32[1,128], index: 3, kind: input, shape index: {}]
  %s4 = inlined_call_operand.<no memory space> [shape: f32[1,1], index: 4, kind: input, shape index: {}]
  %s5 = inlined_call_operand.hbm [shape: f32[1,256], index: 5, kind: output, shape index: {}]
  %s6 = sld [smem:[#allocation0]]
  $region53: #{mlp_forward.1} parent=0
    _
  %s8 = ssub.s32 1, %s6
  %s9 = scalar_select 0, %s8, %s6
  %v10 = vstv %s4
  %11 = vst [vmem:[#allocation2] sm:$0x1] %v10
  $region1: #{mlp_forward.1} parent=0
    #allocation3 [shape = 'u8[1024]{0}', space=vmem, size = 0x400, scoped, tag = 'output window, operand 0']
    #allocation4 [shape = 's32[2]{0}', space=sflag, size = 0x8, scoped, tag = 'scoped memory for mlp_forward.1']
    %12 = vsyncpa [#allocation4], 0
    %s13 = scalar_lea.sflag [#allocation4], 1
    %14 = vsyncpa %s13, 0
    loop: start=0, step=1, limit=4
    $region2: #{mlp_forward.1} parent=1 // loop_pre_header
      _
    $region3: #{mlp_forward.1} parent=1 // loop_header
      %s16 = sphi 0, %s20
      %p17 = scmp.ge.s32.totalorder %s16, 4
      %s26 = sphi 0, %s28
      %s29 = sphi 0, %s26
      %s30 = sphi 0, %s29
      %s46 = sphi 0, %s30
      %s50 = sphi 0, %s50
      %s52 = sphi 0, %s50
      %s53 = sphi 0, %s52
      %s67 = sphi 0, %s53
      %s71 = sphi 0, %s71
      %s73 = sphi 0, %s71
      %s74 = sphi 0, %s73
      %s88 = sphi 0, %s74
      %s92 = sphi 0, %s92
      %s94 = sphi 0, %s92
      %s95 = sphi 0, %s94
      %s109 = sphi 0, %s95
      %s113 = sphi 0, %s113
      %s115 = sphi 0, %s113
      %s116 = sphi 0, %s115
      %s130 = sphi 0, %s116
      %s136 = sphi 0, %s138
      %s139 = sphi 0, %s136
      %s140 = sphi 0, %s139
      %s156 = sphi 0, %s140
    $region4: #{mlp_forward.1} parent=1 // loop_header_branch
      %19 = sbr.rel (%p17) target = $region8
    $region5: #{mlp_forward.1} parent=1 // loop_body
      %s21 = ssub.s32 %s16, 1
      %s22 = ssub.s32 %s16, 2
      %s23 = sadd.s32 %s16, 1
      %s24 = ssub.s32 %s16, %s23
      %p25 = scmp.eq.s32.totalorder %s24, 0
      %s27 = sadd.s32 %s26, 1
      %s28 = scalar_select %p25, %s26, %s27
      %p31 = pneg %p25
      %p32 = scmp.eq.s32.totalorder %s16, 1
      %p33 = por %p31, %p32
      %p34 = scmp.ne.s32.totalorder %s26, %s29
      %p35 = scmp.eq.s32.totalorder %s16, 0
      %p36 = por %p34, %p35
      %p37 = scmp.ne.s32.totalorder %s26, %s29
      %p38 = scmp.eq.s32.totalorder %s21, 1
      %p39 = por %p37, %p38
      %p40 = scmp.ne.s32.totalorder %s29, %s30
      %p41 = scmp.eq.s32.totalorder %s21, 0
      %p42 = por %p40, %p41
      %p43 = scmp.ne.s32.totalorder %s29, %s30
      %p44 = scmp.eq.s32.totalorder %s22, 1
      %p45 = por %p43, %p44
      %p47 = scmp.ne.s32.totalorder %s30, %s46
      %p48 = scmp.eq.s32.totalorder %s22, 0
      %p49 = por %p47, %p48
      %s51 = sadd.s32 %s50, 1
      %p54 = scmp.eq.s32.totalorder %s16, 1
      %p55 = scmp.ne.s32.totalorder %s50, %s52
      %p56 = scmp.eq.s32.totalorder %s16, 0
      %p57 = por %p55, %p56
      %p58 = scmp.ne.s32.totalorder %s50, %s52
      %p59 = scmp.eq.s32.totalorder %s21, 1
      %p60 = por %p58, %p59
      %p61 = scmp.ne.s32.totalorder %s52, %s53
      %p62 = scmp.eq.s32.totalorder %s21, 0
      %p63 = por %p61, %p62
      %p64 = scmp.ne.s32.totalorder %s52, %s53
      %p65 = scmp.eq.s32.totalorder %s22, 1
      %p66 = por %p64, %p65
      %p68 = scmp.ne.s32.totalorder %s53, %s67
      %p69 = scmp.eq.s32.totalorder %s22, 0
      %p70 = por %p68, %p69
      %s72 = sadd.s32 %s71, 1
      %p75 = scmp.eq.s32.totalorder %s16, 1
      %p76 = scmp.ne.s32.totalorder %s71, %s73
      %p77 = scmp.eq.s32.totalorder %s16, 0
      %p78 = por %p76, %p77
      %p79 = scmp.ne.s32.totalorder %s71, %s73
      %p80 = scmp.eq.s32.totalorder %s21, 1
      %p81 = por %p79, %p80
      %p82 = scmp.ne.s32.totalorder %s73, %s74
      %p83 = scmp.eq.s32.totalorder %s21, 0
      %p84 = por %p82, %p83
      %p85 = scmp.ne.s32.totalorder %s73, %s74
      %p86 = scmp.eq.s32.totalorder %s22, 1
      %p87 = por %p85, %p86
      %p89 = scmp.ne.s32.totalorder %s74, %s88
      %p90 = scmp.eq.s32.totalorder %s22, 0
      %p91 = por %p89, %p90
      %s93 = sadd.s32 %s92, 1
      %p96 = scmp.eq.s32.totalorder %s16, 1
      %p97 = scmp.ne.s32.totalorder %s92, %s94
      %p98 = scmp.eq.s32.totalorder %s16, 0
      %p99 = por %p97, %p98
      %p100 = scmp.ne.s32.totalorder %s92, %s94
      %p101 = scmp.eq.s32.totalorder %s21, 1
      %p102 = por %p100, %p101
      %p103 = scmp.ne.s32.totalorder %s94, %s95
      %p104 = scmp.eq.s32.totalorder %s21, 0
      %p105 = por %p103, %p104
      %p106 = scmp.ne.s32.totalorder %s94, %s95
      %p107 = scmp.eq.s32.totalorder %s22, 1
      %p108 = por %p106, %p107
      %p110 = scmp.ne.s32.totalorder %s95, %s109
      %p111 = scmp.eq.s32.totalorder %s22, 0
      %p112 = por %p110, %p111
      %s114 = sadd.s32 %s113, 1
      %p117 = scmp.eq.s32.totalorder %s16, 1
      %p118 = scmp.ne.s32.totalorder %s113, %s115
      %p119 = scmp.eq.s32.totalorder %s16, 0
      %p120 = por %p118, %p119
      %p121 = scmp.ne.s32.totalorder %s113, %s115
      %p122 = scmp.eq.s32.totalorder %s21, 1
      %p123 = por %p121, %p122
      %p124 = scmp.ne.s32.totalorder %s115, %s116
      %p125 = scmp.eq.s32.totalorder %s21, 0
      %p126 = por %p124, %p125
      %p127 = scmp.ne.s32.totalorder %s115, %s116
      %p128 = scmp.eq.s32.totalorder %s22, 1
      %p129 = por %p127, %p128
      %p131 = scmp.ne.s32.totalorder %s116, %s130
      %p132 = scmp.eq.s32.totalorder %s22, 0
      %p133 = por %p131, %p132
      %s134 = ssub.s32 %s16, %s23
      %p135 = scmp.eq.s32.totalorder %s134, 0
      %s137 = sadd.s32 %s136, 1
      %s138 = scalar_select %p135, %s136, %s137
      %p141 = pneg %p135
      %p142 = scmp.eq.s32.totalorder %s16, 1
      %p143 = por %p141, %p142
      %p144 = scmp.ne.s32.totalorder %s136, %s139
      %p145 = scmp.eq.s32.totalorder %s16, 0
      %p146 = por %p144, %p145
      %p147 = scmp.ne.s32.totalorder %s136, %s139
      %p148 = scmp.eq.s32.totalorder %s21, 1
      %p149 = por %p147, %p148
      %p150 = scmp.ne.s32.totalorder %s139, %s140
      %p151 = scmp.eq.s32.totalorder %s21, 0
      %p152 = por %p150, %p151
      %p153 = scmp.ne.s32.totalorder %s139, %s140
      %p154 = scmp.eq.s32.totalorder %s22, 1
      %p155 = por %p153, %p154
      %p157 = scmp.ne.s32.totalorder %s140, %s156
      %p158 = scmp.eq.s32.totalorder %s22, 0
      %p159 = por %p157, %p158
      %p160 = scmp.le.s32.totalorder 1, %s16
      %p161 = scmp.lt.s32.totalorder %s16, 3
      %p162 = pnand %p160, %p161
      %p163 = pneg %p162
      // Predicated region
      $region9: #{mlp_forward.1} parent=5 // pred_check
        _
      $region10: #{mlp_forward.1} parent=5 // pred_check_branch
        %165 = sbr.rel (%p162) target = $region12
      $region11: #{mlp_forward.1} parent=5 // pred_region
        %s166 = ssub.s32 %s16, 1
        // Predicated region
        $region13: #{mlp_forward.1} parent=11 // pred_check
          %p167 = pneg %p63
        $region14: #{mlp_forward.1} parent=11 // pred_check_branch
          %169 = sbr.rel (%p167) target = $region16
        $region15: #{mlp_forward.1} parent=11 // pred_region
          _
        $region16: #{mlp_forward.1} parent=11 // pred_fallthru
          _
        // Predicated region
        $region17: #{mlp_forward.1} parent=11 // pred_check
          %p170 = pneg %p84
        $region18: #{mlp_forward.1} parent=11 // pred_check_branch
          %172 = sbr.rel (%p170) target = $region20
        $region19: #{mlp_forward.1} parent=11 // pred_region
          _
        $region20: #{mlp_forward.1} parent=11 // pred_fallthru
          _
        // Predicated region
        $region21: #{mlp_forward.1} parent=11 // pred_check
          %p173 = pneg %p105
        $region22: #{mlp_forward.1} parent=11 // pred_check_branch
          %175 = sbr.rel (%p173) target = $region24
        $region23: #{mlp_forward.1} parent=11 // pred_region
          _
        $region24: #{mlp_forward.1} parent=11 // pred_fallthru
          _
        // Predicated region
        $region25: #{mlp_forward.1} parent=11 // pred_check
          %p176 = pneg %p126
        $region26: #{mlp_forward.1} parent=11 // pred_check_branch
          %178 = sbr.rel (%p176) target = $region28
        $region27: #{mlp_forward.1} parent=11 // pred_region
          _
        $region28: #{mlp_forward.1} parent=11 // pred_fallthru
          _
      $region12: #{mlp_forward.1} parent=5 // pred_fallthru
        _
      %p179 = scmp.lt.s32.totalorder %s16, 2
      // Predicated region
      $region29: #{mlp_forward.1} parent=5 // pred_check
        %p180 = pneg %p179
      $region30: #{mlp_forward.1} parent=5 // pred_check_branch
        %182 = sbr.rel (%p180) target = $region32
      $region31: #{mlp_forward.1} parent=5 // pred_region
        // Predicated region
        $region33: #{mlp_forward.1} parent=31 // pred_check
          %p183 = pneg %p36
        $region34: #{mlp_forward.1} parent=31 // pred_check_branch
          %185 = sbr.rel (%p183) target = $region36
        $region35: #{mlp_forward.1} parent=31 // pred_region
          %s186 = smul.u32 16, %s16
          %p187 = scmp.lt.s32.totalorder %s186, 31
          %s188 = scalar_select %p187, %s186, 31
          %s189 = smul.addr %s188, 4
          %s190 = scalar_lea.vmem %s0, %s189
          %s191 = smul.u32 16, %s16
        $region36: #{mlp_forward.1} parent=31 // pred_fallthru
          _
      $region32: #{mlp_forward.1} parent=5 // pred_fallthru
        _
      %p192 = scmp.le.s32.totalorder 1, %s16
      %p193 = scmp.lt.s32.totalorder %s16, 3
      %p194 = pnand %p192, %p193
      %p195 = pneg %p194
      // Predicated region
      $region37: #{mlp_forward.1} parent=5 // pred_check
        _
      $region38: #{mlp_forward.1} parent=5 // pred_check_branch
        %197 = sbr.rel (%p194) target = $region40
      $region39: #{mlp_forward.1} parent=5 // pred_region
        %s198 = ssub.s32 %s16, 1
        %s199 = smul.u32 16, %s21
        %p200 = scmp.lt.s32.totalorder %s199, 31
        %s201 = scalar_select %p200, %s199, 31
        %s202 = smul.addr %s201, 4
        %s203 = scalar_lea.vmem %s0, %s202
        %p204 = pneg %p42
        %p205 = pneg %p39
        %p206 = pneg %p63
        %p207 = pneg %p60
        %p208 = pneg %p84
        %p209 = pneg %p81
        %p210 = pneg %p105
        %p211 = pneg %p102
        %p212 = pneg %p126
        %p213 = pneg %p123
        %p214 = pneg %p152
        %p215 = pneg %p149
        %s216 = sand.u32 %s139, 1
        %s217 = scalar_lea.sflag [#allocation4], %s216
        %s218 = sand.u32 %s139, 1
        %s219 = scalar_lea.vmem [#allocation3], %s218
        %s220 = smul.u32 16, %s21
        %p221 = scmp.lt.s32.totalorder %s220, 31
        %s222 = scalar_select %p221, %s220, 31
        %s223 = smul.addr %s222, 4
        %s224 = scalar_lea.vmem %s0, %s223
        %s225 = smul.u32 16, %s21
        %v227 = vld [vmem:[%s224] sm:$0xf]
        %v228 = vld [vmem:[%s224 + $0x4] sm:$0xf]
        %v229 = vld [vmem:[%s224 + $0x8] sm:$0xf]
        %v230 = vld [vmem:[%s224 + $0xc] sm:$0xf]
        %v231 = vld [vmem:[%s224 + $0x10] sm:$0xf]
        %v232 = vld [vmem:[%s224 + $0x14] sm:$0xf]
        %v233 = vld [vmem:[%s224 + $0x18] sm:$0xf]
        %v234 = vld [vmem:[%s224 + $0x1c] sm:$0xf]
        %v235 = vld [vmem:[%s224 + $0x20] sm:$0xf]
        %v236 = vld [vmem:[%s224 + $0x24] sm:$0xf]
        %v237 = vld [vmem:[%s224 + $0x28] sm:$0xf]
        %v238 = vld [vmem:[%s224 + $0x2c] sm:$0xf]
        %v239 = vld [vmem:[%s224 + $0x30] sm:$0xf]
        %v240 = vld [vmem:[%s224 + $0x34] sm:$0xf]
        %v241 = vld [vmem:[%s224 + $0x38] sm:$0xf]
        %v242 = vld [vmem:[%s224 + $0x3c] sm:$0xf]
        %v243 = vld [vmem:[%s1] sm:$0xf]
        %v244 = vld [vmem:[%s1 + $0x4] sm:$0xf]
        %v245 = vld [vmem:[%s1 + $0x8] sm:$0xf]
        %v246 = vld [vmem:[%s1 + $0xc] sm:$0xf]
        %v247 = vld [vmem:[%s1 + $0x10] sm:$0xf]
        %v248 = vld [vmem:[%s1 + $0x14] sm:$0xf]
        %v249 = vld [vmem:[%s1 + $0x18] sm:$0xf]
        %v250 = vld [vmem:[%s1 + $0x1c] sm:$0xf]
        %v251 = vld [vmem:[%s1 + $0x20] sm:$0xf]
        %v252 = vld [vmem:[%s1 + $0x24] sm:$0xf]
        %v253 = vld [vmem:[%s1 + $0x28] sm:$0xf]
        %v254 = vld [vmem:[%s1 + $0x2c] sm:$0xf]
        %v255 = vld [vmem:[%s1 + $0x30] sm:$0xf]
        %v256 = vld [vmem:[%s1 + $0x34] sm:$0xf]
        %v257 = vld [vmem:[%s1 + $0x38] sm:$0xf]
        %v258 = vld [vmem:[%s1 + $0x3c] sm:$0xf]
        %v259 = vld [vmem:[%s2] sm:$0x1]
        %v261 = vlaneseq
        %v262 = vshrl.u32 %v261, 7
        %v263 = vsub.s32 0, %v262
        %v264 = vrot.slane %v259, %v263
        %v282 = vunpack.c.l.b16 %v227
        %v283 = vunpack.c.l.b16 %v228
        %v284 = vunpack.c.l.b16 %v229
        %v285 = vunpack.c.l.b16 %v230
        %v286 = vunpack.c.l.b16 %v231
        %v287 = vunpack.c.l.b16 %v232
        %v288 = vunpack.c.l.b16 %v233
        %v289 = vunpack.c.l.b16 %v234
        %v290 = vunpack.c.l.b16 %v235
        %v291 = vunpack.c.l.b16 %v236
        %v292 = vunpack.c.l.b16 %v237
        %v293 = vunpack.c.l.b16 %v238
        %v294 = vunpack.c.l.b16 %v239
        %v295 = vunpack.c.l.b16 %v240
        %v296 = vunpack.c.l.b16 %v241
        %v297 = vunpack.c.l.b16 %v242
        %v298 = vpack.c.b16 %v283, %v282
        %v299 = vpack.c.b16 %v285, %v284
        %v300 = vpack.c.b16 %v287, %v286
        %v301 = vpack.c.b16 %v289, %v288
        %v302 = vpack.c.b16 %v291, %v290
        %v303 = vpack.c.b16 %v293, %v292
        %v304 = vpack.c.b16 %v295, %v294
        %v305 = vpack.c.b16 %v297, %v296
        %v330 = vunpack.c.l.b16 %v243
        %v331 = vunpack.c.l.b16 %v244
        %v332 = vunpack.c.l.b16 %v245
        %v333 = vunpack.c.l.b16 %v246
        %v334 = vunpack.c.l.b16 %v247
        %v335 = vunpack.c.l.b16 %v248
        %v336 = vunpack.c.l.b16 %v249
        %v337 = vunpack.c.l.b16 %v250
        %v338 = vunpack.c.l.b16 %v251
        %v339 = vunpack.c.l.b16 %v252
        %v340 = vunpack.c.l.b16 %v253
        %v341 = vunpack.c.l.b16 %v254
        %v342 = vunpack.c.l.b16 %v255
        %v343 = vunpack.c.l.b16 %v256
        %v344 = vunpack.c.l.b16 %v257
        %v345 = vunpack.c.l.b16 %v258
        %v346 = vpack.c.b16 %v331, %v330
        %v347 = vpack.c.b16 %v333, %v332
        %v348 = vpack.c.b16 %v335, %v334
        %v349 = vpack.c.b16 %v337, %v336
        %v350 = vpack.c.b16 %v339, %v338
        %v351 = vpack.c.b16 %v341, %v340
        %v352 = vpack.c.b16 %v343, %v342
        %v353 = vpack.c.b16 %v345, %v344
        %362 = vmatprep.subr.bf16.mxu0 0
        %363 = vmatpush1.bf16.msra.mxu0 %v353
        %364 = vmatprep.subr.bf16.mxu0 0
        %365 = vmatpush1.bf16.msra.mxu0 %v352
        %366 = vmatprep.subr.bf16.mxu0 0
        %367 = vmatpush1.bf16.msra.mxu0 %v351
        %368 = vmatprep.subr.bf16.mxu0 0
        %369 = vmatpush1.bf16.msra.mxu0 %v350
        %370 = vmatprep.subr.bf16.mxu0 0
        %371 = vmatpush1.bf16.msra.mxu0 %v349
        %372 = vmatprep.subr.bf16.mxu0 0
        %373 = vmatpush1.bf16.msra.mxu0 %v348
        %374 = vmatprep.subr.bf16.mxu0 0
        %375 = vmatpush1.bf16.msra.mxu0 %v347
        %376 = vmatprep.subr.bf16.mxu0 0
        %377 = vmatpush1.bf16.msra.mxu0 %v346
        %378 = vmatprep.subr.bf16.mxu0 0
        %379 = vmatpush2.bf16.msra.mxu0 0
        %380 = vmatprep.subr.bf16.mxu0 0
        %381 = vmatpush2.bf16.msra.mxu0 0
        %382 = vmatprep.subr.bf16.mxu0 0
        %383 = vmatpush2.bf16.msra.mxu0 0
        %384 = vmatprep.subr.bf16.mxu0 0
        %385 = vmatpush2.bf16.msra.mxu0 0
        %386 = vmatprep.subr.bf16.mxu0 0
        %387 = vmatpush2.bf16.msra.mxu0 0
        %388 = vmatprep.subr.bf16.mxu0 0
        %389 = vmatpush2.bf16.msra.mxu0 0
        %390 = vmatprep.subr.bf16.mxu0 0
        %391 = vmatpush2.bf16.msra.mxu0 0
        %392 = vmatprep.subr.bf16.mxu0 0
        %393 = vmatpush2.bf16.msra.mxu0 0
        %394 = vmatprep.mubr.bf16.mxu0 0
        %395 = vmatmul.mubr.bf16.gmra.mxu0 %v298
        %v396 = vpop.f32.mrf.mxu0
        %v397 = vadd.f32 %v264, %v396
        %v398 = vpop.f32.mrf.mxu0
        %v399 = vpop.f32.mrf.mxu0
        %v400 = vadd.f32 %v264, %v399
        %v401 = vpop.f32.mrf.mxu0
        %402 = vmatprep.mubr.bf16.mxu0 0
        %403 = vmatmul.mubr.bf16.gmra.mxu0 %v299
        %v404 = vpop.f32.mrf.mxu0
        %v405 = vadd.f32 %v264, %v404
        %v406 = vpop.f32.mrf.mxu0
        %v407 = vpop.f32.mrf.mxu0
        %v408 = vadd.f32 %v264, %v407
        %v409 = vpop.f32.mrf.mxu0
        %410 = vmatprep.mubr.bf16.mxu0 0
        %411 = vmatmul.mubr.bf16.gmra.mxu0 %v300
        %v412 = vpop.f32.mrf.mxu0
        %v413 = vadd.f32 %v264, %v412
        %v414 = vpop.f32.mrf.mxu0
        %v415 = vpop.f32.mrf.mxu0
        %v416 = vadd.f32 %v264, %v415
        %v417 = vpop.f32.mrf.mxu0
        %418 = vmatprep.mubr.bf16.mxu0 0
        %419 = vmatmul.mubr.bf16.gmra.mxu0 %v301
        %v420 = vpop.f32.mrf.mxu0
        %v421 = vadd.f32 %v264, %v420
        %v422 = vpop.f32.mrf.mxu0
        %v423 = vpop.f32.mrf.mxu0
        %v424 = vadd.f32 %v264, %v423
        %v425 = vpop.f32.mrf.mxu0
        %426 = vmatprep.mubr.bf16.mxu0 0
        %427 = vmatmul.mubr.bf16.gmra.mxu0 %v302
        %v428 = vpop.f32.mrf.mxu0
        %v429 = vadd.f32 %v264, %v428
        %v430 = vpop.f32.mrf.mxu0
        %v431 = vpop.f32.mrf.mxu0
        %v432 = vadd.f32 %v264, %v431
        %v433 = vpop.f32.mrf.mxu0
        %434 = vmatprep.mubr.bf16.mxu0 0
        %435 = vmatmul.mubr.bf16.gmra.mxu0 %v303
        %v436 = vpop.f32.mrf.mxu0
        %v437 = vadd.f32 %v264, %v436
        %v438 = vpop.f32.mrf.mxu0
        %v439 = vpop.f32.mrf.mxu0
        %v440 = vadd.f32 %v264, %v439
        %v441 = vpop.f32.mrf.mxu0
        %442 = vmatprep.mubr.bf16.mxu0 0
        %443 = vmatmul.mubr.bf16.gmra.mxu0 %v304
        %v444 = vpop.f32.mrf.mxu0
        %v445 = vadd.f32 %v264, %v444
        %v446 = vpop.f32.mrf.mxu0
        %v447 = vpop.f32.mrf.mxu0
        %v448 = vadd.f32 %v264, %v447
        %v449 = vpop.f32.mrf.mxu0
        %450 = vmatprep.mubr.bf16.mxu0 0
        %451 = vmatmul.mubr.bf16.gmra.mxu0 %v305
        %v452 = vpop.f32.mrf.mxu0
        %v453 = vadd.f32 %v264, %v452
        %v454 = vpop.f32.mrf.mxu0
        %v455 = vpop.f32.mrf.mxu0
        %v456 = vadd.f32 %v264, %v455
        %v457 = vpop.f32.mrf.mxu0
        %458 = vdwg.mxu0
        %v459 = vmax.f32 %v397, 0.0
        %v460 = vmax.f32 %v400, 0.0
        %v461 = vmax.f32 %v405, 0.0
        %v462 = vmax.f32 %v408, 0.0
        %v463 = vmax.f32 %v413, 0.0
        %v464 = vmax.f32 %v416, 0.0
        %v465 = vmax.f32 %v421, 0.0
        %v466 = vmax.f32 %v424, 0.0
        %v467 = vmax.f32 %v429, 0.0
        %v468 = vmax.f32 %v432, 0.0
        %v469 = vmax.f32 %v437, 0.0
        %v470 = vmax.f32 %v440, 0.0
        %v471 = vmax.f32 %v445, 0.0
        %v472 = vmax.f32 %v448, 0.0
        %v473 = vmax.f32 %v453, 0.0
        %v474 = vmax.f32 %v456, 0.0
        %v475 = vpack.c.bf16 %v460, %v459
        %v476 = vpack.c.bf16 %v462, %v461
        %v477 = vpack.c.bf16 %v464, %v463
        %v478 = vpack.c.bf16 %v466, %v465
        %v479 = vpack.c.bf16 %v468, %v467
        %v480 = vpack.c.bf16 %v470, %v469
        %v481 = vpack.c.bf16 %v472, %v471
        %v482 = vpack.c.bf16 %v474, %v473
        %s483 = scalar_lea.vmem %s1, 64
        %v484 = vld [vmem:[%s483] sm:$0xf]
        %v485 = vld [vmem:[%s483 + $0x4] sm:$0xf]
        %v486 = vld [vmem:[%s483 + $0x8] sm:$0xf]
        %v487 = vld [vmem:[%s483 + $0xc] sm:$0xf]
        %v488 = vld [vmem:[%s483 + $0x10] sm:$0xf]
        %v489 = vld [vmem:[%s483 + $0x14] sm:$0xf]
        %v490 = vld [vmem:[%s483 + $0x18] sm:$0xf]
        %v491 = vld [vmem:[%s483 + $0x1c] sm:$0xf]
        %v492 = vld [vmem:[%s483 + $0x20] sm:$0xf]
        %v493 = vld [vmem:[%s483 + $0x24] sm:$0xf]
        %v494 = vld [vmem:[%s483 + $0x28] sm:$0xf]
        %v495 = vld [vmem:[%s483 + $0x2c] sm:$0xf]
        %v496 = vld [vmem:[%s483 + $0x30] sm:$0xf]
        %v497 = vld [vmem:[%s483 + $0x34] sm:$0xf]
        %v498 = vld [vmem:[%s483 + $0x38] sm:$0xf]
        %v499 = vld [vmem:[%s483 + $0x3c] sm:$0xf]
        %s500 = scalar_lea.vmem %s2, 1
        %v501 = vld [vmem:[%s500] sm:$0x1]
        %v503 = vlaneseq
        %v504 = vshrl.u32 %v503, 7
        %v505 = vsub.s32 0, %v504
        %v506 = vrot.slane %v501, %v505
        %v524 = vunpack.c.l.b16 %v484
        %v525 = vunpack.c.l.b16 %v485
        %v526 = vunpack.c.l.b16 %v486
        %v527 = vunpack.c.l.b16 %v487
        %v528 = vunpack.c.l.b16 %v488
        %v529 = vunpack.c.l.b16 %v489
        %v530 = vunpack.c.l.b16 %v490
        %v531 = vunpack.c.l.b16 %v491
        %v532 = vunpack.c.l.b16 %v492
        %v533 = vunpack.c.l.b16 %v493
        %v534 = vunpack.c.l.b16 %v494
        %v535 = vunpack.c.l.b16 %v495
        %v536 = vunpack.c.l.b16 %v496
        %v537 = vunpack.c.l.b16 %v497
        %v538 = vunpack.c.l.b16 %v498
        %v539 = vunpack.c.l.b16 %v499
        %v540 = vpack.c.b16 %v525, %v524
        %v541 = vpack.c.b16 %v527, %v526
        %v542 = vpack.c.b16 %v529, %v528
        %v543 = vpack.c.b16 %v531, %v530
        %v544 = vpack.c.b16 %v533, %v532
        %v545 = vpack.c.b16 %v535, %v534
        %v546 = vpack.c.b16 %v537, %v536
        %v547 = vpack.c.b16 %v539, %v538
        %556 = vmatprep.subr.bf16.mxu0 0
        %557 = vmatpush1.bf16.msra.mxu0 %v547
        %558 = vmatprep.subr.bf16.mxu0 0
        %559 = vmatpush1.bf16.msra.mxu0 %v546
        %560 = vmatprep.subr.bf16.mxu0 0
        %561 = vmatpush1.bf16.msra.mxu0 %v545
        %562 = vmatprep.subr.bf16.mxu0 0
        %563 = vmatpush1.bf16.msra.mxu0 %v544
        %564 = vmatprep.subr.bf16.mxu0 0
        %565 = vmatpush1.bf16.msra.mxu0 %v543
        %566 = vmatprep.subr.bf16.mxu0 0
        %567 = vmatpush1.bf16.msra.mxu0 %v542
        %568 = vmatprep.subr.bf16.mxu0 0
        %569 = vmatpush1.bf16.msra.mxu0 %v541
        %570 = vmatprep.subr.bf16.mxu0 0
        %571 = vmatpush1.bf16.msra.mxu0 %v540
        %572 = vmatprep.subr.bf16.mxu0 0
        %573 = vmatpush2.bf16.msra.mxu0 0
        %574 = vmatprep.subr.bf16.mxu0 0
        %575 = vmatpush2.bf16.msra.mxu0 0
        %576 = vmatprep.subr.bf16.mxu0 0
        %577 = vmatpush2.bf16.msra.mxu0 0
        %578 = vmatprep.subr.bf16.mxu0 0
        %579 = vmatpush2.bf16.msra.mxu0 0
        %580 = vmatprep.subr.bf16.mxu0 0
        %581 = vmatpush2.bf16.msra.mxu0 0
        %582 = vmatprep.subr.bf16.mxu0 0
        %583 = vmatpush2.bf16.msra.mxu0 0
        %584 = vmatprep.subr.bf16.mxu0 0
        %585 = vmatpush2.bf16.msra.mxu0 0
        %586 = vmatprep.subr.bf16.mxu0 0
        %587 = vmatpush2.bf16.msra.mxu0 0
        %588 = vmatprep.mubr.bf16.mxu0 0
        %589 = vmatmul.mubr.bf16.gmra.mxu0 %v475
        %v590 = vpop.f32.mrf.mxu0
        %v591 = vadd.f32 %v506, %v590
        %v592 = vpop.f32.mrf.mxu0
        %v593 = vpop.f32.mrf.mxu0
        %v594 = vadd.f32 %v506, %v593
        %v595 = vpop.f32.mrf.mxu0
        %596 = vmatprep.mubr.bf16.mxu0 0
        %597 = vmatmul.mubr.bf16.gmra.mxu0 %v476
        %v598 = vpop.f32.mrf.mxu0
        %v599 = vadd.f32 %v506, %v598
        %v600 = vpop.f32.mrf.mxu0
        %v601 = vpop.f32.mrf.mxu0
        %v602 = vadd.f32 %v506, %v601
        %v603 = vpop.f32.mrf.mxu0
        %604 = vmatprep.mubr.bf16.mxu0 0
        %605 = vmatmul.mubr.bf16.gmra.mxu0 %v477
        %v606 = vpop.f32.mrf.mxu0
        %v607 = vadd.f32 %v506, %v606
        %v608 = vpop.f32.mrf.mxu0
        %v609 = vpop.f32.mrf.mxu0
        %v610 = vadd.f32 %v506, %v609
        %v611 = vpop.f32.mrf.mxu0
        %612 = vmatprep.mubr.bf16.mxu0 0
        %613 = vmatmul.mubr.bf16.gmra.mxu0 %v478
        %v614 = vpop.f32.mrf.mxu0
        %v615 = vadd.f32 %v506, %v614
        %v616 = vpop.f32.mrf.mxu0
        %v617 = vpop.f32.mrf.mxu0
        %v618 = vadd.f32 %v506, %v617
        %v619 = vpop.f32.mrf.mxu0
        %620 = vmatprep.mubr.bf16.mxu0 0
        %621 = vmatmul.mubr.bf16.gmra.mxu0 %v479
        %v622 = vpop.f32.mrf.mxu0
        %v623 = vadd.f32 %v506, %v622
        %v624 = vpop.f32.mrf.mxu0
        %v625 = vpop.f32.mrf.mxu0
        %v626 = vadd.f32 %v506, %v625
        %v627 = vpop.f32.mrf.mxu0
        %628 = vmatprep.mubr.bf16.mxu0 0
        %629 = vmatmul.mubr.bf16.gmra.mxu0 %v480
        %v630 = vpop.f32.mrf.mxu0
        %v631 = vadd.f32 %v506, %v630
        %v632 = vpop.f32.mrf.mxu0
        %v633 = vpop.f32.mrf.mxu0
        %v634 = vadd.f32 %v506, %v633
        %v635 = vpop.f32.mrf.mxu0
        %636 = vmatprep.mubr.bf16.mxu0 0
        %637 = vmatmul.mubr.bf16.gmra.mxu0 %v481
        %v638 = vpop.f32.mrf.mxu0
        %v639 = vadd.f32 %v506, %v638
        %v640 = vpop.f32.mrf.mxu0
        %v641 = vpop.f32.mrf.mxu0
        %v642 = vadd.f32 %v506, %v641
        %v643 = vpop.f32.mrf.mxu0
        %644 = vmatprep.mubr.bf16.mxu0 0
        %645 = vmatmul.mubr.bf16.gmra.mxu0 %v482
        %v646 = vpop.f32.mrf.mxu0
        %v647 = vadd.f32 %v506, %v646
        %v648 = vpop.f32.mrf.mxu0
        %v649 = vpop.f32.mrf.mxu0
        %v650 = vadd.f32 %v506, %v649
        %v651 = vpop.f32.mrf.mxu0
        %652 = vdwg.mxu0
        %v653 = vmax.f32 %v591, 0.0
        %v654 = vmax.f32 %v594, 0.0
        %v655 = vmax.f32 %v599, 0.0
        %v656 = vmax.f32 %v602, 0.0
        %v657 = vmax.f32 %v607, 0.0
        %v658 = vmax.f32 %v610, 0.0
        %v659 = vmax.f32 %v615, 0.0
        %v660 = vmax.f32 %v618, 0.0
        %v661 = vmax.f32 %v623, 0.0
        %v662 = vmax.f32 %v626, 0.0
        %v663 = vmax.f32 %v631, 0.0
        %v664 = vmax.f32 %v634, 0.0
        %v665 = vmax.f32 %v639, 0.0
        %v666 = vmax.f32 %v642, 0.0
        %v667 = vmax.f32 %v647, 0.0
        %v668 = vmax.f32 %v650, 0.0
        %v669 = vpack.c.bf16 %v654, %v653
        %v670 = vpack.c.bf16 %v656, %v655
        %v671 = vpack.c.bf16 %v658, %v657
        %v672 = vpack.c.bf16 %v660, %v659
        %v673 = vpack.c.bf16 %v662, %v661
        %v674 = vpack.c.bf16 %v664, %v663
        %v675 = vpack.c.bf16 %v666, %v665
        %v676 = vpack.c.bf16 %v668, %v667
        %s677 = scalar_lea.vmem %s1, 128
        %v678 = vld [vmem:[%s677] sm:$0xf]
        %v679 = vld [vmem:[%s677 + $0x4] sm:$0xf]
        %v680 = vld [vmem:[%s677 + $0x8] sm:$0xf]
        %v681 = vld [vmem:[%s677 + $0xc] sm:$0xf]
        %v682 = vld [vmem:[%s677 + $0x10] sm:$0xf]
        %v683 = vld [vmem:[%s677 + $0x14] sm:$0xf]
        %v684 = vld [vmem:[%s677 + $0x18] sm:$0xf]
        %v685 = vld [vmem:[%s677 + $0x1c] sm:$0xf]
        %v686 = vld [vmem:[%s677 + $0x20] sm:$0xf]
        %v687 = vld [vmem:[%s677 + $0x24] sm:$0xf]
        %v688 = vld [vmem:[%s677 + $0x28] sm:$0xf]
        %v689 = vld [vmem:[%s677 + $0x2c] sm:$0xf]
        %v690 = vld [vmem:[%s677 + $0x30] sm:$0xf]
        %v691 = vld [vmem:[%s677 + $0x34] sm:$0xf]
        %v692 = vld [vmem:[%s677 + $0x38] sm:$0xf]
        %v693 = vld [vmem:[%s677 + $0x3c] sm:$0xf]
        %s694 = scalar_lea.vmem %s2, 2
        %v695 = vld [vmem:[%s694] sm:$0x1]
        %v697 = vlaneseq
        %v698 = vshrl.u32 %v697, 7
        %v699 = vsub.s32 0, %v698
        %v700 = vrot.slane %v695, %v699
        %v718 = vunpack.c.l.b16 %v678
        %v719 = vunpack.c.l.b16 %v679
        %v720 = vunpack.c.l.b16 %v680
        %v721 = vunpack.c.l.b16 %v681
        %v722 = vunpack.c.l.b16 %v682
        %v723 = vunpack.c.l.b16 %v683
        %v724 = vunpack.c.l.b16 %v684
        %v725 = vunpack.c.l.b16 %v685
        %v726 = vunpack.c.l.b16 %v686
        %v727 = vunpack.c.l.b16 %v687
        %v728 = vunpack.c.l.b16 %v688
        %v729 = vunpack.c.l.b16 %v689
        %v730 = vunpack.c.l.b16 %v690
        %v731 = vunpack.c.l.b16 %v691
        %v732 = vunpack.c.l.b16 %v692
        %v733 = vunpack.c.l.b16 %v693
        %v734 = vpack.c.b16 %v719, %v718
        %v735 = vpack.c.b16 %v721, %v720
        %v736 = vpack.c.b16 %v723, %v722
        %v737 = vpack.c.b16 %v725, %v724
        %v738 = vpack.c.b16 %v727, %v726
        %v739 = vpack.c.b16 %v729, %v728
        %v740 = vpack.c.b16 %v731, %v730
        %v741 = vpack.c.b16 %v733, %v732
        %750 = vmatprep.subr.bf16.mxu0 0
        %751 = vmatpush1.bf16.msra.mxu0 %v741
        %752 = vmatprep.subr.bf16.mxu0 0
        %753 = vmatpush1.bf16.msra.mxu0 %v740
        %754 = vmatprep.subr.bf16.mxu0 0
        %755 = vmatpush1.bf16.msra.mxu0 %v739
        %756 = vmatprep.subr.bf16.mxu0 0
        %757 = vmatpush1.bf16.msra.mxu0 %v738
        %758 = vmatprep.subr.bf16.mxu0 0
        %759 = vmatpush1.bf16.msra.mxu0 %v737
        %760 = vmatprep.subr.bf16.mxu0 0
        %761 = vmatpush1.bf16.msra.mxu0 %v736
        %762 = vmatprep.subr.bf16.mxu0 0
        %763 = vmatpush1.bf16.msra.mxu0 %v735
        %764 = vmatprep.subr.bf16.mxu0 0
        %765 = vmatpush1.bf16.msra.mxu0 %v734
        %766 = vmatprep.subr.bf16.mxu0 0
        %767 = vmatpush2.bf16.msra.mxu0 0
        %768 = vmatprep.subr.bf16.mxu0 0
        %769 = vmatpush2.bf16.msra.mxu0 0
        %770 = vmatprep.subr.bf16.mxu0 0
        %771 = vmatpush2.bf16.msra.mxu0 0
        %772 = vmatprep.subr.bf16.mxu0 0
        %773 = vmatpush2.bf16.msra.mxu0 0
        %774 = vmatprep.subr.bf16.mxu0 0
        %775 = vmatpush2.bf16.msra.mxu0 0
        %776 = vmatprep.subr.bf16.mxu0 0
        %777 = vmatpush2.bf16.msra.mxu0 0
        %778 = vmatprep.subr.bf16.mxu0 0
        %779 = vmatpush2.bf16.msra.mxu0 0
        %780 = vmatprep.subr.bf16.mxu0 0
        %781 = vmatpush2.bf16.msra.mxu0 0
        %782 = vmatprep.mubr.bf16.mxu0 0
        %783 = vmatmul.mubr.bf16.gmra.mxu0 %v669
        %v784 = vpop.f32.mrf.mxu0
        %v785 = vadd.f32 %v700, %v784
        %v786 = vpop.f32.mrf.mxu0
        %v787 = vpop.f32.mrf.mxu0
        %v788 = vadd.f32 %v700, %v787
        %v789 = vpop.f32.mrf.mxu0
        %790 = vmatprep.mubr.bf16.mxu0 0
        %791 = vmatmul.mubr.bf16.gmra.mxu0 %v670
        %v792 = vpop.f32.mrf.mxu0
        %v793 = vadd.f32 %v700, %v792
        %v794 = vpop.f32.mrf.mxu0
        %v795 = vpop.f32.mrf.mxu0
        %v796 = vadd.f32 %v700, %v795
        %v797 = vpop.f32.mrf.mxu0
        %798 = vmatprep.mubr.bf16.mxu0 0
        %799 = vmatmul.mubr.bf16.gmra.mxu0 %v671
        %v800 = vpop.f32.mrf.mxu0
        %v801 = vadd.f32 %v700, %v800
        %v802 = vpop.f32.mrf.mxu0
        %v803 = vpop.f32.mrf.mxu0
        %v804 = vadd.f32 %v700, %v803
        %v805 = vpop.f32.mrf.mxu0
        %806 = vmatprep.mubr.bf16.mxu0 0
        %807 = vmatmul.mubr.bf16.gmra.mxu0 %v672
        %v808 = vpop.f32.mrf.mxu0
        %v809 = vadd.f32 %v700, %v808
        %v810 = vpop.f32.mrf.mxu0
        %v811 = vpop.f32.mrf.mxu0
        %v812 = vadd.f32 %v700, %v811
        %v813 = vpop.f32.mrf.mxu0
        %814 = vmatprep.mubr.bf16.mxu0 0
        %815 = vmatmul.mubr.bf16.gmra.mxu0 %v673
        %v816 = vpop.f32.mrf.mxu0
        %v817 = vadd.f32 %v700, %v816
        %v818 = vpop.f32.mrf.mxu0
        %v819 = vpop.f32.mrf.mxu0
        %v820 = vadd.f32 %v700, %v819
        %v821 = vpop.f32.mrf.mxu0
        %822 = vmatprep.mubr.bf16.mxu0 0
        %823 = vmatmul.mubr.bf16.gmra.mxu0 %v674
        %v824 = vpop.f32.mrf.mxu0
        %v825 = vadd.f32 %v700, %v824
        %v826 = vpop.f32.mrf.mxu0
        %v827 = vpop.f32.mrf.mxu0
        %v828 = vadd.f32 %v700, %v827
        %v829 = vpop.f32.mrf.mxu0
        %830 = vmatprep.mubr.bf16.mxu0 0
        %831 = vmatmul.mubr.bf16.gmra.mxu0 %v675
        %v832 = vpop.f32.mrf.mxu0
        %v833 = vadd.f32 %v700, %v832
        %v834 = vpop.f32.mrf.mxu0
        %v835 = vpop.f32.mrf.mxu0
        %v836 = vadd.f32 %v700, %v835
        %v837 = vpop.f32.mrf.mxu0
        %838 = vmatprep.mubr.bf16.mxu0 0
        %839 = vmatmul.mubr.bf16.gmra.mxu0 %v676
        %v840 = vpop.f32.mrf.mxu0
        %v841 = vadd.f32 %v700, %v840
        %v842 = vpop.f32.mrf.mxu0
        %v843 = vpop.f32.mrf.mxu0
        %v844 = vadd.f32 %v700, %v843
        %v845 = vpop.f32.mrf.mxu0
        %846 = vdwg.mxu0
        %v847 = vmax.f32 %v785, 0.0
        %v848 = vmax.f32 %v788, 0.0
        %v849 = vmax.f32 %v793, 0.0
        %v850 = vmax.f32 %v796, 0.0
        %v851 = vmax.f32 %v801, 0.0
        %v852 = vmax.f32 %v804, 0.0
        %v853 = vmax.f32 %v809, 0.0
        %v854 = vmax.f32 %v812, 0.0
        %v855 = vmax.f32 %v817, 0.0
        %v856 = vmax.f32 %v820, 0.0
        %v857 = vmax.f32 %v825, 0.0
        %v858 = vmax.f32 %v828, 0.0
        %v859 = vmax.f32 %v833, 0.0
        %v860 = vmax.f32 %v836, 0.0
        %v861 = vmax.f32 %v841, 0.0
        %v862 = vmax.f32 %v844, 0.0
        %v863 = vld [vmem:[%s3] sm:$0x1]
        %v865 = vlaneseq
        %v866 = vshrl.u32 %v865, 7
        %v867 = vsub.s32 0, %v866
        %v868 = vrot.slane %v863, %v867
        %v870 = vmul.f32 %v847, %v868
        %v871 = vmul.f32 %v848, %v868
        %v872 = vmul.f32 %v849, %v868
        %v873 = vmul.f32 %v850, %v868
        %v874 = vmul.f32 %v851, %v868
        %v875 = vmul.f32 %v852, %v868
        %v876 = vmul.f32 %v853, %v868
        %v877 = vmul.f32 %v854, %v868
        %v878 = vmul.f32 %v855, %v868
        %v879 = vmul.f32 %v856, %v868
        %v880 = vmul.f32 %v857, %v868
        %v881 = vmul.f32 %v858, %v868
        %v882 = vmul.f32 %v859, %v868
        %v883 = vmul.f32 %v860, %v868
        %v884 = vmul.f32 %v861, %v868
        %v885 = vmul.f32 %v862, %v868
        %886 = vadd.xlane.f32.xlu0 %v870
        %v887 = vpop.xlane.xlu0 %886
        %888 = vadd.xlane.f32.xlu0 %v871
        %v889 = vpop.xlane.xlu0 %888
        %890 = vadd.xlane.f32.xlu0 %v872
        %v891 = vpop.xlane.xlu0 %890
        %892 = vadd.xlane.f32.xlu0 %v873
        %v893 = vpop.xlane.xlu0 %892
        %894 = vadd.xlane.f32.xlu0 %v874
        %v895 = vpop.xlane.xlu0 %894
        %896 = vadd.xlane.f32.xlu0 %v875
        %v897 = vpop.xlane.xlu0 %896
        %898 = vadd.xlane.f32.xlu0 %v876
        %v899 = vpop.xlane.xlu0 %898
        %900 = vadd.xlane.f32.xlu0 %v877
        %v901 = vpop.xlane.xlu0 %900
        %902 = vadd.xlane.f32.xlu0 %v878
        %v903 = vpop.xlane.xlu0 %902
        %904 = vadd.xlane.f32.xlu0 %v879
        %v905 = vpop.xlane.xlu0 %904
        %906 = vadd.xlane.f32.xlu0 %v880
        %v907 = vpop.xlane.xlu0 %906
        %908 = vadd.xlane.f32.xlu0 %v881
        %v909 = vpop.xlane.xlu0 %908
        %910 = vadd.xlane.f32.xlu0 %v882
        %v911 = vpop.xlane.xlu0 %910
        %912 = vadd.xlane.f32.xlu0 %v883
        %v913 = vpop.xlane.xlu0 %912
        %914 = vadd.xlane.f32.xlu0 %v884
        %v915 = vpop.xlane.xlu0 %914
        %916 = vadd.xlane.f32.xlu0 %v885
        %v917 = vpop.xlane.xlu0 %916
        %v918 = vld [vmem:[#allocation2] sm:$0x1]
        %s919 = vtos %v918
        %v920 = vstv %s919
        %v921 = vadd.f32 %v887, %v920
        %v922 = vadd.f32 %v889, %v920
        %v923 = vadd.f32 %v891, %v920
        %v924 = vadd.f32 %v893, %v920
        %v925 = vadd.f32 %v895, %v920
        %v926 = vadd.f32 %v897, %v920
        %v927 = vadd.f32 %v899, %v920
        %v928 = vadd.f32 %v901, %v920
        %v929 = vadd.f32 %v903, %v920
        %v930 = vadd.f32 %v905, %v920
        %v931 = vadd.f32 %v907, %v920
        %v932 = vadd.f32 %v909, %v920
        %v933 = vadd.f32 %v911, %v920
        %v934 = vadd.f32 %v913, %v920
        %v935 = vadd.f32 %v915, %v920
        %v936 = vadd.f32 %v917, %v920
        %v937 = vsub.f32 0.0, %v921
        %v938 = vsub.f32 0.0, %v922
        %v939 = vsub.f32 0.0, %v923
        %v940 = vsub.f32 0.0, %v924
        %v941 = vsub.f32 0.0, %v925
        %v942 = vsub.f32 0.0, %v926
        %v943 = vsub.f32 0.0, %v927
        %v944 = vsub.f32 0.0, %v928
        %v945 = vsub.f32 0.0, %v929
        %v946 = vsub.f32 0.0, %v930
        %v947 = vsub.f32 0.0, %v931
        %v948 = vsub.f32 0.0, %v932
        %v949 = vsub.f32 0.0, %v933
        %v950 = vsub.f32 0.0, %v934
        %v951 = vsub.f32 0.0, %v935
        %v952 = vsub.f32 0.0, %v936
        %v953 = vmul.f32 %v937, 1.442695
        %v954 = vpow.pop %v953
        %v955 = vmul.f32 %v938, 1.442695
        %v956 = vpow.pop %v955
        %v957 = vmul.f32 %v939, 1.442695
        %v958 = vpow.pop %v957
        %v959 = vmul.f32 %v940, 1.442695
        %v960 = vpow.pop %v959
        %v961 = vmul.f32 %v941, 1.442695
        %v962 = vpow.pop %v961
        %v963 = vmul.f32 %v942, 1.442695
        %v964 = vpow.pop %v963
        %v965 = vmul.f32 %v943, 1.442695
        %v966 = vpow.pop %v965
        %v967 = vmul.f32 %v944, 1.442695
        %v968 = vpow.pop %v967
        %v969 = vmul.f32 %v945, 1.442695
        %v970 = vpow.pop %v969
        %v971 = vmul.f32 %v946, 1.442695
        %v972 = vpow.pop %v971
        %v973 = vmul.f32 %v947, 1.442695
        %v974 = vpow.pop %v973
        %v975 = vmul.f32 %v948, 1.442695
        %v976 = vpow.pop %v975
        %v977 = vmul.f32 %v949, 1.442695
        %v978 = vpow.pop %v977
        %v979 = vmul.f32 %v950, 1.442695
        %v980 = vpow.pop %v979
        %v981 = vmul.f32 %v951, 1.442695
        %v982 = vpow.pop %v981
        %v983 = vmul.f32 %v952, 1.442695
        %v984 = vpow.pop %v983
        %v985 = vadd.f32 %v954, 1.0
        %v986 = vadd.f32 %v956, 1.0
        %v987 = vadd.f32 %v958, 1.0
        %v988 = vadd.f32 %v960, 1.0
        %v989 = vadd.f32 %v962, 1.0
        %v990 = vadd.f32 %v964, 1.0
        %v991 = vadd.f32 %v966, 1.0
        %v992 = vadd.f32 %v968, 1.0
        %v993 = vadd.f32 %v970, 1.0
        %v994 = vadd.f32 %v972, 1.0
        %v995 = vadd.f32 %v974, 1.0
        %v996 = vadd.f32 %v976, 1.0
        %v997 = vadd.f32 %v978, 1.0
        %v998 = vadd.f32 %v980, 1.0
        %v999 = vadd.f32 %v982, 1.0
        %v1000 = vadd.f32 %v984, 1.0
        %v1001 = vrcp.pop %v985
        %v1002 = vrcp.pop %v986
        %v1003 = vrcp.pop %v987
        %v1004 = vrcp.pop %v988
        %v1005 = vrcp.pop %v989
        %v1006 = vrcp.pop %v990
        %v1007 = vrcp.pop %v991
        %v1008 = vrcp.pop %v992
        %v1009 = vrcp.pop %v993
        %v1010 = vrcp.pop %v994
        %v1011 = vrcp.pop %v995
        %v1012 = vrcp.pop %v996
        %v1013 = vrcp.pop %v997
        %v1014 = vrcp.pop %v998
        %v1015 = vrcp.pop %v999
        %v1016 = vrcp.pop %v1000
        %v1033 = vlaneseq
        %v1034 = vand.u32 %v1033, 127
        %v1035 = vlaneseq
        %v1036 = vshrl.u32 %v1035, 7
        %v1037 = vsub.s32 %v1034, %v1036
        %v1038 = vrot.slane %v1001, %v1037
        %v1039 = vadd.s32 %v1034, 4294967288
        %v1040 = vlaneseq
        %v1041 = vshrl.u32 %v1040, 7
        %v1042 = vsub.s32 %v1039, %v1041
        %v1043 = vrot.slane %v1002, %v1042
        %vm1044 = vcmask 130112
        %v1045 = vsel %vm1044, %v1043, %v1038
        %v1046 = vadd.s32 %v1034, 4294967280
        %v1047 = vlaneseq
        %v1048 = vshrl.u32 %v1047, 7
        %v1049 = vsub.s32 %v1046, %v1048
        %v1050 = vrot.slane %v1003, %v1049
        %vm1051 = vcmask 195712
        %v1052 = vsel %vm1051, %v1050, %v1045
        %v1053 = vadd.s32 %v1034, 4294967272
        %v1054 = vlaneseq
        %v1055 = vshrl.u32 %v1054, 7
        %v1056 = vsub.s32 %v1053, %v1055
        %v1057 = vrot.slane %v1004, %v1056
        %vm1058 = vcmask 261312
        %v1059 = vsel %vm1058, %v1057, %v1052
        %v1060 = vadd.s32 %v1034, 4294967264
        %v1061 = vlaneseq
        %v1062 = vshrl.u32 %v1061, 7
        %v1063 = vsub.s32 %v1060, %v1062
        %v1064 = vrot.slane %v1005, %v1063
        %vm1065 = vcmask 326912
        %v1066 = vsel %vm1065, %v1064, %v1059
        %v1067 = vadd.s32 %v1034, 4294967256
        %v1068 = vlaneseq
        %v1069 = vshrl.u32 %v1068, 7
        %v1070 = vsub.s32 %v1067, %v1069
        %v1071 = vrot.slane %v1006, %v1070
        %vm1072 = vcmask 392512
        %v1073 = vsel %vm1072, %v1071, %v1066
        %v1074 = vadd.s32 %v1034, 4294967248
        %v1075 = vlaneseq
        %v1076 = vshrl.u32 %v1075, 7
        %v1077 = vsub.s32 %v1074, %v1076
        %v1078 = vrot.slane %v1007, %v1077
        %vm1079 = vcmask 458112
        %v1080 = vsel %vm1079, %v1078, %v1073
        %v1081 = vadd.s32 %v1034, 4294967240
        %v1082 = vlaneseq
        %v1083 = vshrl.u32 %v1082, 7
        %v1084 = vsub.s32 %v1081, %v1083
        %v1085 = vrot.slane %v1008, %v1084
        %vm1086 = vcmask 523712
        %v1087 = vsel %vm1086, %v1085, %v1080
        %v1088 = vadd.s32 %v1034, 4294967232
        %v1089 = vlaneseq
        %v1090 = vshrl.u32 %v1089, 7
        %v1091 = vsub.s32 %v1088, %v1090
        %v1092 = vrot.slane %v1009, %v1091
        %vm1093 = vcmask 589312
        %v1094 = vsel %vm1093, %v1092, %v1087
        %v1095 = vadd.s32 %v1034, 4294967224
        %v1096 = vlaneseq
        %v1097 = vshrl.u32 %v1096, 7
        %v1098 = vsub.s32 %v1095, %v1097
        %v1099 = vrot.slane %v1010, %v1098
        %vm1100 = vcmask 654912
        %v1101 = vsel %vm1100, %v1099, %v1094
        %v1102 = vadd.s32 %v1034, 4294967216
        %v1103 = vlaneseq
        %v1104 = vshrl.u32 %v1103, 7
        %v1105 = vsub.s32 %v1102, %v1104
        %v1106 = vrot.slane %v1011, %v1105
        %vm1107 = vcmask 720512
        %v1108 = vsel %vm1107, %v1106, %v1101
        %v1109 = vadd.s32 %v1034, 4294967208
        %v1110 = vlaneseq
        %v1111 = vshrl.u32 %v1110, 7
        %v1112 = vsub.s32 %v1109, %v1111
        %v1113 = vrot.slane %v1012, %v1112
        %vm1114 = vcmask 786112
        %v1115 = vsel %vm1114, %v1113, %v1108
        %v1116 = vadd.s32 %v1034, 4294967200
        %v1117 = vlaneseq
        %v1118 = vshrl.u32 %v1117, 7
        %v1119 = vsub.s32 %v1116, %v1118
        %v1120 = vrot.slane %v1013, %v1119
        %vm1121 = vcmask 851712
        %v1122 = vsel %vm1121, %v1120, %v1115
        %v1123 = vadd.s32 %v1034, 4294967192
        %v1124 = vlaneseq
        %v1125 = vshrl.u32 %v1124, 7
        %v1126 = vsub.s32 %v1123, %v1125
        %v1127 = vrot.slane %v1014, %v1126
        %vm1128 = vcmask 917312
        %v1129 = vsel %vm1128, %v1127, %v1122
        %v1130 = vadd.s32 %v1034, 4294967184
        %v1131 = vlaneseq
        %v1132 = vshrl.u32 %v1131, 7
        %v1133 = vsub.s32 %v1130, %v1132
        %v1134 = vrot.slane %v1015, %v1133
        %vm1135 = vcmask 982912
        %v1136 = vsel %vm1135, %v1134, %v1129
        %v1137 = vadd.s32 %v1034, 4294967176
        %v1138 = vlaneseq
        %v1139 = vshrl.u32 %v1138, 7
        %v1140 = vsub.s32 %v1137, %v1139
        %v1141 = vrot.slane %v1016, %v1140
        %vm1142 = vcmask 1048512
        %v1143 = vsel %vm1142, %v1141, %v1136
        %1145 = vst [vmem:[%s219] sm:$0x1] %v1143
        %s1146 = sand.u32 %s139, 1
        %s1147 = scalar_lea.sflag [#allocation4], %s1146
        %s1148 = sand.u32 %s139, 1
        %s1149 = scalar_lea.vmem [#allocation3], %s1148
        // Predicated region
        $region41: #{mlp_forward.1} parent=39 // pred_check
          %p1150 = pneg %p149
        $region42: #{mlp_forward.1} parent=39 // pred_check_branch
          %1152 = sbr.rel (%p1150) target = $region44
        $region43: #{mlp_forward.1} parent=39 // pred_region
          %s1154 = ssub.s32 16, 16
          %1155 = vsyncadd %s1147, %s1154
          %s1156 = smul.addr %s21, 16
          %s1157 = scalar_lea.hbm %s5, %s1156
          %s1159 = sshll.u32 %s1149, 4
          %s1160 = int_to_ptr.vmem [resolvable:$true] %s1159
          %1162 = dma.vmem_to_hbm [thread:$0]  %s1160, 16, %s1157, %s1147
        $region44: #{mlp_forward.1} parent=39 // pred_fallthru
          _
      $region40: #{mlp_forward.1} parent=5 // pred_fallthru
        _
      %p1163 = scmp.le.s32.totalorder 2, %s16
      // Predicated region
      $region45: #{mlp_forward.1} parent=5 // pred_check
        %p1164 = pneg %p1163
      $region46: #{mlp_forward.1} parent=5 // pred_check_branch
        %1166 = sbr.rel (%p1164) target = $region48
      $region47: #{mlp_forward.1} parent=5 // pred_region
        %s1167 = ssub.s32 %s16, 2
        // Predicated region
        $region49: #{mlp_forward.1} parent=47 // pred_check
          %p1168 = pneg %p155
        $region50: #{mlp_forward.1} parent=47 // pred_check_branch
          %1170 = sbr.rel (%p1168) target = $region52
        $region51: #{mlp_forward.1} parent=47 // pred_region
          %s1171 = sand.u32 %s140, 1
          %s1172 = scalar_lea.sflag [#allocation4], %s1171
          %s1173 = sand.u32 %s140, 1
          %s1174 = scalar_lea.vmem [#allocation3], %s1173
          %1175 = dma.done %s1172, 16
        $region52: #{mlp_forward.1} parent=47 // pred_fallthru
          _
      $region48: #{mlp_forward.1} parent=5 // pred_fallthru
        _
    $region6: #{mlp_forward.1} parent=1 // loop_footer
      %s20 = sadd.s32 1, %s16
    $region7: #{mlp_forward.1} parent=1 // loop_footer_branch
      %15 = sbr.rel target = $region3
    $region8: #{mlp_forward.1} parent=1 // loop_exit
      _
    %1176 = vsyncpa [#allocation4], 1
    %s1177 = scalar_lea.sflag [#allocation4], 1
    %1178 = vsyncpa %s1177, 1

</llo_original>
